<compile_context>
chip_gen: v7x
topology: tpu7x:2x2x1
jax: 0.10.0
libtpu: 0.0.40
codegen_flags: <defaults>
</compile_context>

<pallas_src>
import functools

import jax
import jax.numpy as jnp
from jax import lax
from jax.experimental import pallas as pl
from jax.experimental.pallas import tpu as pltpu


def _round_up(n, m):
    return ((n + m - 1) // m) * m


def _classifier_kernel(*refs, has_mask):
    # has_mask=False: (x, w1, b1, w2, b2, out)
    # has_mask=True : (x, mask, w1, b1, w2, b2, out)
    if has_mask:
        x_ref, mask_ref, w1_ref, b1_ref, w2_ref, b2_ref, o_ref = refs
    else:
        x_ref, w1_ref, b1_ref, w2_ref, b2_ref, o_ref = refs
        mask_ref = None

    x = x_ref[...]

    # clf1: x @ W1 + b1  (f32 accumulation on the MXU, full f32 precision)
    h = jnp.dot(x, w1_ref[...],
                preferred_element_type=jnp.float32,
                precision=lax.Precision.HIGHEST)
    h = h + b1_ref[...].astype(jnp.float32)

    # Dropout (training only): mask already holds keep/(1-p) scaling.
    if mask_ref is not None:
        h = h * mask_ref[...].astype(jnp.float32)

    # clf2: h @ W2 + b2
    y = jnp.dot(h.astype(w2_ref.dtype), w2_ref[...],
                preferred_element_type=jnp.float32,
                precision=lax.Precision.HIGHEST)
    y = y + b2_ref[...].astype(jnp.float32)
    o_ref[...] = y.astype(o_ref.dtype)


def classifier_forward(x, w1, b1, w2, b2, *,
                       dropout_p=0.0, train=False, rng_key=None, row_tile=512):
    """Classifier forward.

    x : (..., 2*dim)
    w1: (2*dim, dim)      = torch clf1.weight.T
    b1: (dim,)            = torch clf1.bias
    w2: (dim, n_classes)  = torch clf2.weight.T
    b2: (n_classes,)      = torch clf2.bias
    Returns (..., n_classes).
    """
    lead = x.shape[:-1]
    fin = x.shape[-1]
    hidden = w1.shape[1]
    n_classes = w2.shape[1]
    assert w1.shape[0] == fin and w2.shape[0] == hidden

    x2 = x.reshape(-1, fin)
    R = x2.shape[0]

    # Large row tiles (amortize per-grid-step overhead); pad instead of
    # asserting divisibility so arbitrary batch*seq sizes work.
    rt = max(8, min(row_tile, _round_up(R, 8)))
    R_pad = _round_up(R, rt)
    if R_pad != R:
        x2 = jnp.pad(x2, ((0, R_pad - R), (0, 0)))

    has_mask = bool(train) and float(dropout_p) > 0.0
    kernel = functools.partial(_classifier_kernel, has_mask=has_mask)

    in_specs = [pl.BlockSpec((rt, fin), lambda i: (i, 0))]          # x rows
    operands = [x2]
    if has_mask:
        if rng_key is None:
            rng_key = jax.random.PRNGKey(0)
        keep = jax.random.bernoulli(rng_key, 1.0 - float(dropout_p),
                                    (R_pad, hidden))
        mask = keep.astype(jnp.float32) * (1.0 / (1.0 - float(dropout_p)))
        in_specs.append(pl.BlockSpec((rt, hidden), lambda i: (i, 0)))  # mask rows
        operands.append(mask)

    in_specs += [
        pl.BlockSpec((fin, hidden), lambda i: (0, 0)),        # W1 (VMEM-resident)
        pl.BlockSpec((1, hidden), lambda i: (0, 0)),          # b1
        pl.BlockSpec((hidden, n_classes), lambda i: (0, 0)),  # W2 (VMEM-resident)
        pl.BlockSpec((1, n_classes), lambda i: (0, 0)),       # b2
    ]
    operands += [w1, b1.reshape(1, hidden), w2, b2.reshape(1, n_classes)]

    out = pl.pallas_call(
        kernel,
        out_shape=jax.ShapeDtypeStruct((R_pad, n_classes), x.dtype),
        grid_spec=pltpu.PrefetchScalarGridSpec(
            num_scalar_prefetch=0,
            grid=(R_pad // rt,),
            in_specs=in_specs,
            out_specs=pl.BlockSpec((rt, n_classes), lambda i: (i, 0)),
        ),
        compiler_params=pltpu.CompilerParams(
            # Row axis is independent -> shards across v7x's 2 TensorCores.
            dimension_semantics=("parallel",),
        ),
    )(*operands)

    if R_pad != R:
        out = out[:R]
    return out.reshape(*lead, n_classes)


def reference(x, w1, b1, w2, b2):
    # Eval-mode forward (dropout = identity), full f32 precision.
    h = jnp.dot(x, w1, precision=lax.Precision.HIGHEST) + b1
    return jnp.dot(h, w2, precision=lax.Precision.HIGHEST) + b2


if __name__ == "__main__":
    B, S, DIM, N_CLASSES = 2, 8, 32, 16
    DROPOUT = 0.1

    key = jax.random.PRNGKey(0)
    kx, k1, kb1, k2, kb2, kdrop = jax.random.split(key, 6)
    x = jax.random.normal(kx, (B, S, 2 * DIM), dtype=jnp.float32)
    # Weights stored pre-transposed (in, out) so the kernel computes x @ W^T
    # with no in-kernel transpose.
    w1 = jax.random.normal(k1, (2 * DIM, DIM), dtype=jnp.float32) / jnp.sqrt(2.0 * DIM)
    b1 = 0.01 * jax.random.normal(kb1, (DIM,), dtype=jnp.float32)
    w2 = jax.random.normal(k2, (DIM, N_CLASSES), dtype=jnp.float32) / jnp.sqrt(1.0 * DIM)
    b2 = 0.01 * jax.random.normal(kb2, (N_CLASSES,), dtype=jnp.float32)

    # Eval-mode forward: dropout is identity -> must match the reference.
    out = classifier_forward(x, w1, b1, w2, b2, dropout_p=DROPOUT, train=False)
    out = jax.block_until_ready(out)
    ref = reference(x, w1, b1, w2, b2)
    assert out.shape == (B, S, N_CLASSES)
    assert jnp.allclose(out, ref, atol=1e-4, rtol=1e-4), "mismatch vs reference"

    # Training-mode forward: exercises the in-kernel dropout-mask path.
    out_tr = classifier_forward(x, w1, b1, w2, b2,
                                dropout_p=DROPOUT, train=True, rng_key=kdrop)
    out_tr = jax.block_until_ready(out_tr)
    assert out_tr.shape == (B, S, N_CLASSES)
    assert bool(jnp.all(jnp.isfinite(out_tr)))

    print("KERNEL_OK")
</pallas_src>

<mosaic_0001>
module attributes {stable_mosaic.version = 11 : i64} {
  func.func @_classifier_kernel(%arg0: i32, %arg1: memref<16x64xf32, #tpu.memory_space<vmem>>, %arg2: memref<64x32xf32, #tpu.memory_space<vmem>>, %arg3: memref<1x32xf32, #tpu.memory_space<vmem>>, %arg4: memref<32x16xf32, #tpu.memory_space<vmem>>, %arg5: memref<1x16xf32, #tpu.memory_space<vmem>>, %arg6: memref<16x16xf32, #tpu.memory_space<vmem>>) attributes {dimension_semantics = [#tpu.dimension_semantics<parallel>], iteration_bounds = array<i64: 1>, scalar_prefetch = 0 : i64, scratch_operands = 0 : i64, tpu.core_type = #tpu.core_type<tc>, window_params = [{transform_indices = @transform_0, window_bounds = array<i64: 16, 64>}, {pipeline_mode = #tpu.pipeline_mode<synchronous>, transform_indices = @transform_1, window_bounds = array<i64: 64, 32>}, {pipeline_mode = #tpu.pipeline_mode<synchronous>, transform_indices = @transform_2, window_bounds = array<i64: 1, 32>}, {pipeline_mode = #tpu.pipeline_mode<synchronous>, transform_indices = @transform_3, window_bounds = array<i64: 32, 16>}, {pipeline_mode = #tpu.pipeline_mode<synchronous>, transform_indices = @transform_4, window_bounds = array<i64: 1, 16>}, {transform_indices = @transform_5, window_bounds = array<i64: 16, 16>}]} {
    %c0 = arith.constant 0 : index
    %c0_0 = arith.constant 0 : index
    %0 = vector.load %arg1[%c0, %c0_0] : memref<16x64xf32, #tpu.memory_space<vmem>>, vector<16x64xf32>
    %c0_1 = arith.constant 0 : index
    %c0_2 = arith.constant 0 : index
    %1 = vector.load %arg2[%c0_1, %c0_2] : memref<64x32xf32, #tpu.memory_space<vmem>>, vector<64x32xf32>
    %cst = arith.constant dense<0.000000e+00> : vector<16x32xf32>
    %2 = tpu.matmul %0, %1, %cst {dimension_numbers = #tpu.dot_dimension_numbers<[1], [0], [0], [1], [0, 0, 1, 1], [], []>, precision = #tpu.contract_precision<fp32>} : vector<16x64xf32>, vector<64x32xf32>, vector<16x32xf32> -> vector<16x32xf32>
    %c0_3 = arith.constant 0 : index
    %c0_4 = arith.constant 0 : index
    %3 = vector.load %arg3[%c0_3, %c0_4] : memref<1x32xf32, #tpu.memory_space<vmem>>, vector<1x32xf32>
    %4 = vector.broadcast %3 : vector<1x32xf32> to vector<16x32xf32>
    %5 = arith.addf %2, %4 : vector<16x32xf32>
    %c0_5 = arith.constant 0 : index
    %c0_6 = arith.constant 0 : index
    %6 = vector.load %arg4[%c0_5, %c0_6] : memref<32x16xf32, #tpu.memory_space<vmem>>, vector<32x16xf32>
    %cst_7 = arith.constant dense<0.000000e+00> : vector<16x16xf32>
    %7 = tpu.matmul %5, %6, %cst_7 {dimension_numbers = #tpu.dot_dimension_numbers<[1], [0], [0], [1], [0, 0, 1, 1], [], []>, precision = #tpu.contract_precision<fp32>} : vector<16x32xf32>, vector<32x16xf32>, vector<16x16xf32> -> vector<16x16xf32>
    %c0_8 = arith.constant 0 : index
    %c0_9 = arith.constant 0 : index
    %8 = vector.load %arg5[%c0_8, %c0_9] : memref<1x16xf32, #tpu.memory_space<vmem>>, vector<1x16xf32>
    %9 = vector.broadcast %8 : vector<1x16xf32> to vector<16x16xf32>
    %10 = arith.addf %7, %9 : vector<16x16xf32>
    %c0_10 = arith.constant 0 : index
    %c0_11 = arith.constant 0 : index
    %11 = vector.load %arg6[%c0_10, %c0_11] : memref<16x16xf32, #tpu.memory_space<vmem>>, vector<16x16xf32>
    tpu.vector_store %arg6[%c0_10, %c0_11], %10 {strides = array<i32>} : memref<16x16xf32, #tpu.memory_space<vmem>>, vector<16x16xf32>,
    return
  }
  func.func @transform_0(%arg0: i32) -> (i32, i32) {
    %c0_i32 = arith.constant 0 : i32
    %c0_i32_0 = arith.constant 0 : i32
    return %arg0, %c0_i32 : i32, i32
  }
  func.func @transform_1(%arg0: i32) -> (i32, i32) {
    %c0_i32 = arith.constant 0 : i32
    %c0_i32_0 = arith.constant 0 : i32
    %c0_i32_1 = arith.constant 0 : i32
    return %c0_i32, %c0_i32_0 : i32, i32
  }
  func.func @transform_2(%arg0: i32) -> (i32, i32) {
    %c0_i32 = arith.constant 0 : i32
    %c0_i32_0 = arith.constant 0 : i32
    %c0_i32_1 = arith.constant 0 : i32
    return %c0_i32, %c0_i32_0 : i32, i32
  }
  func.func @transform_3(%arg0: i32) -> (i32, i32) {
    %c0_i32 = arith.constant 0 : i32
    %c0_i32_0 = arith.constant 0 : i32
    %c0_i32_1 = arith.constant 0 : i32
    return %c0_i32, %c0_i32_0 : i32, i32
  }
  func.func @transform_4(%arg0: i32) -> (i32, i32) {
    %c0_i32 = arith.constant 0 : i32
    %c0_i32_0 = arith.constant 0 : i32
    %c0_i32_1 = arith.constant 0 : i32
    return %c0_i32, %c0_i32_0 : i32, i32
  }
  func.func @transform_5(%arg0: i32) -> (i32, i32) {
    %c0_i32 = arith.constant 0 : i32
    %c0_i32_0 = arith.constant 0 : i32
    return %arg0, %c0_i32 : i32, i32
  }
}

</mosaic_0001>

<llo_original>
// kernel: tpu_custom_call.1
$region0: #{tpu_custom_call.1}
  #allocation0 [shape = 'u32[]', space=smem, size = 0x4, offset = 0x4, fixed_abs, tag = 'smem constant byte address 0x4 - core index']
  #allocation1 [shape = 'u32[144,128]{1,0:T(1,128)}', space=vmem, size = 0x12000, scoped, tag = 'internal scratch']
  %s0 = inlined_call_operand.vmem [shape: f32[16,64], index: 0, kind: input, shape index: {}]
  %s1 = inlined_call_operand.vmem [shape: f32[64,32], index: 1, kind: input, shape index: {}]
  %s2 = inlined_call_operand.vmem [shape: f32[1,32], index: 2, kind: input, shape index: {}]
  %s3 = inlined_call_operand.vmem [shape: f32[32,16], index: 3, kind: input, shape index: {}]
  %s4 = inlined_call_operand.vmem [shape: f32[1,16], index: 4, kind: input, shape index: {}]
  %s5 = inlined_call_operand.hbm [shape: f32[16,16], index: 5, kind: output, shape index: {}]
  %s6 = sld [smem:[#allocation0]]
  $region30: #{tpu_custom_call.1} parent=0
    _
  %s8 = ssub.s32 1, %s6
  %s9 = scalar_select 0, %s8, %s6
  $region1: #{tpu_custom_call.1} parent=0
    #allocation2 [shape = 'u8[8192]{0}', space=vmem, size = 0x2000, scoped, tag = 'output window, operand 0, single buffered']
    #allocation3 [shape = 's32[1]{0}', space=sflag, size = 0x4, scoped, tag = 'scoped memory for tpu_custom_call.1']
    %10 = vsyncpa [#allocation3], 0
    // Predicated region
    $region2: #{tpu_custom_call.1} parent=1 // pred_check
      _
    $region3: #{tpu_custom_call.1} parent=1 // pred_check_branch
      %12 = sbr.rel (0) target = $region5
    $region4: #{tpu_custom_call.1} parent=1 // pred_region
      _
    $region5: #{tpu_custom_call.1} parent=1 // pred_fallthru
      _
    // Predicated region
    $region6: #{tpu_custom_call.1} parent=1 // pred_check
      _
    $region7: #{tpu_custom_call.1} parent=1 // pred_check_branch
      %14 = sbr.rel (0) target = $region9
    $region8: #{tpu_custom_call.1} parent=1 // pred_region
      _
    $region9: #{tpu_custom_call.1} parent=1 // pred_fallthru
      _
    // Predicated region
    $region10: #{tpu_custom_call.1} parent=1 // pred_check
      _
    $region11: #{tpu_custom_call.1} parent=1 // pred_check_branch
      %16 = sbr.rel (0) target = $region13
    $region12: #{tpu_custom_call.1} parent=1 // pred_region
      _
    $region13: #{tpu_custom_call.1} parent=1 // pred_fallthru
      _
    // Predicated region
    $region14: #{tpu_custom_call.1} parent=1 // pred_check
      _
    $region15: #{tpu_custom_call.1} parent=1 // pred_check_branch
      %18 = sbr.rel (0) target = $region17
    $region16: #{tpu_custom_call.1} parent=1 // pred_region
      _
    $region17: #{tpu_custom_call.1} parent=1 // pred_fallthru
      _
    // Predicated region
    $region18: #{tpu_custom_call.1} parent=1 // pred_check
      _
    $region19: #{tpu_custom_call.1} parent=1 // pred_check_branch
      %20 = sbr.rel (0) target = $region21
    $region20: #{tpu_custom_call.1} parent=1 // pred_region
      _
    $region21: #{tpu_custom_call.1} parent=1 // pred_fallthru
      _
    %v21 = vld [vmem:[%s0] sm:$0xff]
    %v22 = vld [vmem:[%s0 + $0x8] sm:$0xff]
    %v23 = vld [vmem:[%s1] sm:$0xff]
    %v24 = vld [vmem:[%s1 + $0x8] sm:$0xff]
    %v25 = vld [vmem:[%s1 + $0x10] sm:$0xff]
    %v26 = vld [vmem:[%s1 + $0x18] sm:$0xff]
    %v27 = vld [vmem:[%s1 + $0x20] sm:$0xff]
    %v28 = vld [vmem:[%s1 + $0x28] sm:$0xff]
    %v29 = vld [vmem:[%s1 + $0x30] sm:$0xff]
    %v30 = vld [vmem:[%s1 + $0x38] sm:$0xff]
    %v31 = vld [vmem:[%s2] sm:$0x1]
    %v33 = vlaneseq
    %v34 = vshrl.u32 %v33, 7
    %v35 = vsub.s32 0, %v34
    %v36 = vrot.slane %v31, %v35
    %vm38 = vcmask 523264
    %v40 = vsel %vm38, %v21, 0
    %v43 = vsel %vm38, %v22, 0
    %45 = vmatprep.subr.mxu0 0.0
    %v46 = vand.u32 %v23, 4294901760
    %47 = vmatpush1.msra.mxu0 %v46
    %48 = vmatprep.subr.mxu0 0.0
    %v49 = vand.u32 %v24, 4294901760
    %50 = vmatpush1.msra.mxu0 %v49
    %51 = vmatprep.subr.mxu0 0.0
    %v52 = vand.u32 %v25, 4294901760
    %53 = vmatpush1.msra.mxu0 %v52
    %54 = vmatprep.subr.mxu0 0.0
    %v55 = vand.u32 %v26, 4294901760
    %56 = vmatpush1.msra.mxu0 %v55
    %57 = vmatprep.subr.mxu0 0.0
    %v58 = vand.u32 %v27, 4294901760
    %59 = vmatpush1.msra.mxu0 %v58
    %60 = vmatprep.subr.mxu0 0.0
    %v61 = vand.u32 %v28, 4294901760
    %62 = vmatpush1.msra.mxu0 %v61
    %63 = vmatprep.subr.mxu0 0.0
    %v64 = vand.u32 %v29, 4294901760
    %65 = vmatpush1.msra.mxu0 %v64
    %66 = vmatprep.subr.mxu0 0.0
    %v67 = vand.u32 %v30, 4294901760
    %68 = vmatpush1.msra.mxu0 %v67
    %69 = vmatprep.subr.mxu0 0.0
    %70 = vmatpush1.msra.mxu0 0.0
    %71 = vmatprep.subr.mxu0 0.0
    %72 = vmatpush1.msra.mxu0 0.0
    %73 = vmatprep.subr.mxu0 0.0
    %74 = vmatpush1.msra.mxu0 0.0
    %75 = vmatprep.subr.mxu0 0.0
    %76 = vmatpush1.msra.mxu0 0.0
    %77 = vmatprep.subr.mxu0 0.0
    %78 = vmatpush1.msra.mxu0 0.0
    %79 = vmatprep.subr.mxu0 0.0
    %80 = vmatpush1.msra.mxu0 0.0
    %81 = vmatprep.subr.mxu0 0.0
    %82 = vmatpush1.msra.mxu0 0.0
    %83 = vmatprep.subr.mxu0 0.0
    %84 = vmatpush1.msra.mxu0 0.0
    %85 = vmatprep.subr.mxu0 0.0
    %86 = vmatpush1.msra.mxu0 0.0
    %87 = vmatprep.subr.mxu0 0.0
    %88 = vmatpush1.msra.mxu0 0.0
    %89 = vmatprep.subr.mxu0 0.0
    %90 = vmatpush1.msra.mxu0 0.0
    %91 = vmatprep.subr.mxu0 0.0
    %92 = vmatpush1.msra.mxu0 0.0
    %93 = vmatprep.subr.mxu0 0.0
    %94 = vmatpush1.msra.mxu0 0.0
    %95 = vmatprep.subr.mxu0 0.0
    %96 = vmatpush1.msra.mxu0 0.0
    %97 = vmatprep.subr.mxu0 0.0
    %98 = vmatpush1.msra.mxu0 0.0
    %99 = vmatprep.subr.mxu0 0.0
    %100 = vmatpush1.msra.mxu0 0.0
    %101 = vmatprep.subr.mxu0 0.0
    %102 = vmatpush1.msra.mxu0 0.0
    %103 = vmatprep.subr.mxu0 0.0
    %104 = vmatpush1.msra.mxu0 0.0
    %105 = vmatprep.subr.mxu0 0.0
    %106 = vmatpush1.msra.mxu0 0.0
    %107 = vmatprep.subr.mxu0 0.0
    %108 = vmatpush1.msra.mxu0 0.0
    %109 = vmatprep.subr.mxu0 0.0
    %110 = vmatpush1.msra.mxu0 0.0
    %111 = vmatprep.subr.mxu0 0.0
    %112 = vmatpush1.msra.mxu0 0.0
    %113 = vmatprep.subr.mxu0 0.0
    %114 = vmatpush1.msra.mxu0 0.0
    %115 = vmatprep.subr.mxu0 0.0
    %116 = vmatpush1.msra.mxu0 0.0
    %117 = vmatprep.mubr.f32.mxu0 0.0
    %v118 = vand.u32 %v40, 4294901760
    %v119 = vsub.f32 %v40, %v118
    %v120 = vand.u32 %v119, 4294901760
    %v121 = vsub.f32 %v119, %v120
    %v122 = vand.u32 %v121, 4294901760
    %123 = vmatmul.mubr.f32.gmra.mrb[0].mxu0 %v122
    %v124 = vpop.f32.mrb[0].mxu0
    %v125 = vadd.f32 %v36, %v124
    %v126 = vpop.f32.mrb[0].mxu0
    %127 = vmatprep.mubr.f32.mxu0 0.0
    %v128 = vand.u32 %v43, 4294901760
    %v129 = vsub.f32 %v43, %v128
    %v130 = vand.u32 %v129, 4294901760
    %v131 = vsub.f32 %v129, %v130
    %v132 = vand.u32 %v131, 4294901760
    %133 = vmatmul.mubr.f32.gmra.mrb[0].mxu0 %v132
    %v134 = vpop.f32.mrb[0].mxu0
    %v135 = vadd.f32 %v36, %v134
    %v136 = vpop.f32.mrb[0].mxu0
    %137 = vdwg.mxu0
    %138 = vmatprep.subr.mxu0 0.0
    %v139 = vand.u32 %v23, 4294901760
    %v140 = vsub.f32 %v23, %v139
    %v141 = vand.u32 %v140, 4294901760
    %v142 = vsub.f32 %v140, %v141
    %v143 = vand.u32 %v142, 4294901760
    %144 = vmatpush1.msra.mxu0 %v143
    %145 = vmatprep.subr.mxu0 0.0
    %v146 = vand.u32 %v24, 4294901760
    %v147 = vsub.f32 %v24, %v146
    %v148 = vand.u32 %v147, 4294901760
    %v149 = vsub.f32 %v147, %v148
    %v150 = vand.u32 %v149, 4294901760
    %151 = vmatpush1.msra.mxu0 %v150
    %152 = vmatprep.subr.mxu0 0.0
    %v153 = vand.u32 %v25, 4294901760
    %v154 = vsub.f32 %v25, %v153
    %v155 = vand.u32 %v154, 4294901760
    %v156 = vsub.f32 %v154, %v155
    %v157 = vand.u32 %v156, 4294901760
    %158 = vmatpush1.msra.mxu0 %v157
    %159 = vmatprep.subr.mxu0 0.0
    %v160 = vand.u32 %v26, 4294901760
    %v161 = vsub.f32 %v26, %v160
    %v162 = vand.u32 %v161, 4294901760
    %v163 = vsub.f32 %v161, %v162
    %v164 = vand.u32 %v163, 4294901760
    %165 = vmatpush1.msra.mxu0 %v164
    %166 = vmatprep.subr.mxu0 0.0
    %v167 = vand.u32 %v27, 4294901760
    %v168 = vsub.f32 %v27, %v167
    %v169 = vand.u32 %v168, 4294901760
    %v170 = vsub.f32 %v168, %v169
    %v171 = vand.u32 %v170, 4294901760
    %172 = vmatpush1.msra.mxu0 %v171
    %173 = vmatprep.subr.mxu0 0.0
    %v174 = vand.u32 %v28, 4294901760
    %v175 = vsub.f32 %v28, %v174
    %v176 = vand.u32 %v175, 4294901760
    %v177 = vsub.f32 %v175, %v176
    %v178 = vand.u32 %v177, 4294901760
    %179 = vmatpush1.msra.mxu0 %v178
    %180 = vmatprep.subr.mxu0 0.0
    %v181 = vand.u32 %v29, 4294901760
    %v182 = vsub.f32 %v29, %v181
    %v183 = vand.u32 %v182, 4294901760
    %v184 = vsub.f32 %v182, %v183
    %v185 = vand.u32 %v184, 4294901760
    %186 = vmatpush1.msra.mxu0 %v185
    %187 = vmatprep.subr.mxu0 0.0
    %v188 = vand.u32 %v30, 4294901760
    %v189 = vsub.f32 %v30, %v188
    %v190 = vand.u32 %v189, 4294901760
    %v191 = vsub.f32 %v189, %v190
    %v192 = vand.u32 %v191, 4294901760
    %193 = vmatpush1.msra.mxu0 %v192
    %194 = vmatprep.subr.mxu0 0.0
    %195 = vmatpush1.msra.mxu0 0.0
    %196 = vmatprep.subr.mxu0 0.0
    %197 = vmatpush1.msra.mxu0 0.0
    %198 = vmatprep.subr.mxu0 0.0
    %199 = vmatpush1.msra.mxu0 0.0
    %200 = vmatprep.subr.mxu0 0.0
    %201 = vmatpush1.msra.mxu0 0.0
    %202 = vmatprep.subr.mxu0 0.0
    %203 = vmatpush1.msra.mxu0 0.0
    %204 = vmatprep.subr.mxu0 0.0
    %205 = vmatpush1.msra.mxu0 0.0
    %206 = vmatprep.subr.mxu0 0.0
    %207 = vmatpush1.msra.mxu0 0.0
    %208 = vmatprep.subr.mxu0 0.0
    %209 = vmatpush1.msra.mxu0 0.0
    %210 = vmatprep.subr.mxu0 0.0
    %211 = vmatpush1.msra.mxu0 0.0
    %212 = vmatprep.subr.mxu0 0.0
    %213 = vmatpush1.msra.mxu0 0.0
    %214 = vmatprep.subr.mxu0 0.0
    %215 = vmatpush1.msra.mxu0 0.0
    %216 = vmatprep.subr.mxu0 0.0
    %217 = vmatpush1.msra.mxu0 0.0
    %218 = vmatprep.subr.mxu0 0.0
    %219 = vmatpush1.msra.mxu0 0.0
    %220 = vmatprep.subr.mxu0 0.0
    %221 = vmatpush1.msra.mxu0 0.0
    %222 = vmatprep.subr.mxu0 0.0
    %223 = vmatpush1.msra.mxu0 0.0
    %224 = vmatprep.subr.mxu0 0.0
    %225 = vmatpush1.msra.mxu0 0.0
    %226 = vmatprep.subr.mxu0 0.0
    %227 = vmatpush1.msra.mxu0 0.0
    %228 = vmatprep.subr.mxu0 0.0
    %229 = vmatpush1.msra.mxu0 0.0
    %230 = vmatprep.subr.mxu0 0.0
    %231 = vmatpush1.msra.mxu0 0.0
    %232 = vmatprep.subr.mxu0 0.0
    %233 = vmatpush1.msra.mxu0 0.0
    %234 = vmatprep.subr.mxu0 0.0
    %235 = vmatpush1.msra.mxu0 0.0
    %236 = vmatprep.subr.mxu0 0.0
    %237 = vmatpush1.msra.mxu0 0.0
    %238 = vmatprep.subr.mxu0 0.0
    %239 = vmatpush1.msra.mxu0 0.0
    %240 = vmatprep.subr.mxu0 0.0
    %241 = vmatpush1.msra.mxu0 0.0
    %242 = vmatprep.mubr.f32.mxu0 0.0
    %v243 = vand.u32 %v40, 4294901760
    %244 = vmatmul.mubr.f32.gmra.mrb[0].mxu0 %v243
    %v245 = vpop.f32.mrb[0].mxu0
    %v246 = vadd.f32 %v125, %v245
    %v247 = vpop.f32.mrb[0].mxu0
    %248 = vmatprep.mubr.f32.mxu0 0.0
    %v249 = vand.u32 %v43, 4294901760
    %250 = vmatmul.mubr.f32.gmra.mrb[0].mxu0 %v249
    %v251 = vpop.f32.mrb[0].mxu0
    %v252 = vadd.f32 %v135, %v251
    %v253 = vpop.f32.mrb[0].mxu0
    %254 = vdwg.mxu0
    %255 = vmatprep.subr.mxu0 0.0
    %v256 = vand.u32 %v23, 4294901760
    %v257 = vsub.f32 %v23, %v256
    %258 = vmatpush1.msra.mxu0 %v257
    %259 = vmatprep.subr.mxu0 0.0
    %v260 = vand.u32 %v24, 4294901760
    %v261 = vsub.f32 %v24, %v260
    %262 = vmatpush1.msra.mxu0 %v261
    %263 = vmatprep.subr.mxu0 0.0
    %v264 = vand.u32 %v25, 4294901760
    %v265 = vsub.f32 %v25, %v264
    %266 = vmatpush1.msra.mxu0 %v265
    %267 = vmatprep.subr.mxu0 0.0
    %v268 = vand.u32 %v26, 4294901760
    %v269 = vsub.f32 %v26, %v268
    %270 = vmatpush1.msra.mxu0 %v269
    %271 = vmatprep.subr.mxu0 0.0
    %v272 = vand.u32 %v27, 4294901760
    %v273 = vsub.f32 %v27, %v272
    %274 = vmatpush1.msra.mxu0 %v273
    %275 = vmatprep.subr.mxu0 0.0
    %v276 = vand.u32 %v28, 4294901760
    %v277 = vsub.f32 %v28, %v276
    %278 = vmatpush1.msra.mxu0 %v277
    %279 = vmatprep.subr.mxu0 0.0
    %v280 = vand.u32 %v29, 4294901760
    %v281 = vsub.f32 %v29, %v280
    %282 = vmatpush1.msra.mxu0 %v281
    %283 = vmatprep.subr.mxu0 0.0
    %v284 = vand.u32 %v30, 4294901760
    %v285 = vsub.f32 %v30, %v284
    %286 = vmatpush1.msra.mxu0 %v285
    %287 = vmatprep.subr.mxu0 0.0
    %288 = vmatpush1.msra.mxu0 0.0
    %289 = vmatprep.subr.mxu0 0.0
    %290 = vmatpush1.msra.mxu0 0.0
    %291 = vmatprep.subr.mxu0 0.0
    %292 = vmatpush1.msra.mxu0 0.0
    %293 = vmatprep.subr.mxu0 0.0
    %294 = vmatpush1.msra.mxu0 0.0
    %295 = vmatprep.subr.mxu0 0.0
    %296 = vmatpush1.msra.mxu0 0.0
    %297 = vmatprep.subr.mxu0 0.0
    %298 = vmatpush1.msra.mxu0 0.0
    %299 = vmatprep.subr.mxu0 0.0
    %300 = vmatpush1.msra.mxu0 0.0
    %301 = vmatprep.subr.mxu0 0.0
    %302 = vmatpush1.msra.mxu0 0.0
    %303 = vmatprep.subr.mxu0 0.0
    %304 = vmatpush1.msra.mxu0 0.0
    %305 = vmatprep.subr.mxu0 0.0
    %306 = vmatpush1.msra.mxu0 0.0
    %307 = vmatprep.subr.mxu0 0.0
    %308 = vmatpush1.msra.mxu0 0.0
    %309 = vmatprep.subr.mxu0 0.0
    %310 = vmatpush1.msra.mxu0 0.0
    %311 = vmatprep.subr.mxu0 0.0
    %312 = vmatpush1.msra.mxu0 0.0
    %313 = vmatprep.subr.mxu0 0.0
    %314 = vmatpush1.msra.mxu0 0.0
    %315 = vmatprep.subr.mxu0 0.0
    %316 = vmatpush1.msra.mxu0 0.0
    %317 = vmatprep.subr.mxu0 0.0
    %318 = vmatpush1.msra.mxu0 0.0
    %319 = vmatprep.subr.mxu0 0.0
    %320 = vmatpush1.msra.mxu0 0.0
    %321 = vmatprep.subr.mxu0 0.0
    %322 = vmatpush1.msra.mxu0 0.0
    %323 = vmatprep.subr.mxu0 0.0
    %324 = vmatpush1.msra.mxu0 0.0
    %325 = vmatprep.subr.mxu0 0.0
    %326 = vmatpush1.msra.mxu0 0.0
    %327 = vmatprep.subr.mxu0 0.0
    %328 = vmatpush1.msra.mxu0 0.0
    %329 = vmatprep.subr.mxu0 0.0
    %330 = vmatpush1.msra.mxu0 0.0
    %331 = vmatprep.subr.mxu0 0.0
    %332 = vmatpush1.msra.mxu0 0.0
    %333 = vmatprep.subr.mxu0 0.0
    %334 = vmatpush1.msra.mxu0 0.0
    %335 = vmatprep.mubr.f32.mxu0 0.0
    %v336 = vand.u32 %v40, 4294901760
    %v337 = vsub.f32 %v40, %v336
    %338 = vmatmul.mubr.f32.gmra.mrb[0].mxu0 %v337
    %v339 = vpop.f32.mrb[0].mxu0
    %v340 = vadd.f32 %v246, %v339
    %v341 = vpop.f32.mrb[0].mxu0
    %342 = vmatprep.mubr.f32.mxu0 0.0
    %v343 = vand.u32 %v43, 4294901760
    %v344 = vsub.f32 %v43, %v343
    %345 = vmatmul.mubr.f32.gmra.mrb[0].mxu0 %v344
    %v346 = vpop.f32.mrb[0].mxu0
    %v347 = vadd.f32 %v252, %v346
    %v348 = vpop.f32.mrb[0].mxu0
    %349 = vdwg.mxu0
    %350 = vmatprep.subr.mxu0 0.0
    %v351 = vand.u32 %v23, 4294901760
    %352 = vmatpush1.msra.mxu0 %v351
    %353 = vmatprep.subr.mxu0 0.0
    %v354 = vand.u32 %v24, 4294901760
    %355 = vmatpush1.msra.mxu0 %v354
    %356 = vmatprep.subr.mxu0 0.0
    %v357 = vand.u32 %v25, 4294901760
    %358 = vmatpush1.msra.mxu0 %v357
    %359 = vmatprep.subr.mxu0 0.0
    %v360 = vand.u32 %v26, 4294901760
    %361 = vmatpush1.msra.mxu0 %v360
    %362 = vmatprep.subr.mxu0 0.0
    %v363 = vand.u32 %v27, 4294901760
    %364 = vmatpush1.msra.mxu0 %v363
    %365 = vmatprep.subr.mxu0 0.0
    %v366 = vand.u32 %v28, 4294901760
    %367 = vmatpush1.msra.mxu0 %v366
    %368 = vmatprep.subr.mxu0 0.0
    %v369 = vand.u32 %v29, 4294901760
    %370 = vmatpush1.msra.mxu0 %v369
    %371 = vmatprep.subr.mxu0 0.0
    %v372 = vand.u32 %v30, 4294901760
    %373 = vmatpush1.msra.mxu0 %v372
    %374 = vmatprep.subr.mxu0 0.0
    %375 = vmatpush1.msra.mxu0 0.0
    %376 = vmatprep.subr.mxu0 0.0
    %377 = vmatpush1.msra.mxu0 0.0
    %378 = vmatprep.subr.mxu0 0.0
    %379 = vmatpush1.msra.mxu0 0.0
    %380 = vmatprep.subr.mxu0 0.0
    %381 = vmatpush1.msra.mxu0 0.0
    %382 = vmatprep.subr.mxu0 0.0
    %383 = vmatpush1.msra.mxu0 0.0
    %384 = vmatprep.subr.mxu0 0.0
    %385 = vmatpush1.msra.mxu0 0.0
    %386 = vmatprep.subr.mxu0 0.0
    %387 = vmatpush1.msra.mxu0 0.0
    %388 = vmatprep.subr.mxu0 0.0
    %389 = vmatpush1.msra.mxu0 0.0
    %390 = vmatprep.subr.mxu0 0.0
    %391 = vmatpush1.msra.mxu0 0.0
    %392 = vmatprep.subr.mxu0 0.0
    %393 = vmatpush1.msra.mxu0 0.0
    %394 = vmatprep.subr.mxu0 0.0
    %395 = vmatpush1.msra.mxu0 0.0
    %396 = vmatprep.subr.mxu0 0.0
    %397 = vmatpush1.msra.mxu0 0.0
    %398 = vmatprep.subr.mxu0 0.0
    %399 = vmatpush1.msra.mxu0 0.0
    %400 = vmatprep.subr.mxu0 0.0
    %401 = vmatpush1.msra.mxu0 0.0
    %402 = vmatprep.subr.mxu0 0.0
    %403 = vmatpush1.msra.mxu0 0.0
    %404 = vmatprep.subr.mxu0 0.0
    %405 = vmatpush1.msra.mxu0 0.0
    %406 = vmatprep.subr.mxu0 0.0
    %407 = vmatpush1.msra.mxu0 0.0
    %408 = vmatprep.subr.mxu0 0.0
    %409 = vmatpush1.msra.mxu0 0.0
    %410 = vmatprep.subr.mxu0 0.0
    %411 = vmatpush1.msra.mxu0 0.0
    %412 = vmatprep.subr.mxu0 0.0
    %413 = vmatpush1.msra.mxu0 0.0
    %414 = vmatprep.subr.mxu0 0.0
    %415 = vmatpush1.msra.mxu0 0.0
    %416 = vmatprep.subr.mxu0 0.0
    %417 = vmatpush1.msra.mxu0 0.0
    %418 = vmatprep.subr.mxu0 0.0
    %419 = vmatpush1.msra.mxu0 0.0
    %420 = vmatprep.subr.mxu0 0.0
    %421 = vmatpush1.msra.mxu0 0.0
    %422 = vmatprep.mubr.f32.mxu0 0.0
    %v423 = vand.u32 %v40, 4294901760
    %v424 = vsub.f32 %v40, %v423
    %v425 = vand.u32 %v424, 4294901760
    %426 = vmatmul.mubr.f32.gmra.mrb[0].mxu0 %v425
    %v427 = vpop.f32.mrb[0].mxu0
    %v428 = vadd.f32 %v340, %v427
    %v429 = vpop.f32.mrb[0].mxu0
    %430 = vmatprep.mubr.f32.mxu0 0.0
    %v431 = vand.u32 %v43, 4294901760
    %v432 = vsub.f32 %v43, %v431
    %v433 = vand.u32 %v432, 4294901760
    %434 = vmatmul.mubr.f32.gmra.mrb[0].mxu0 %v433
    %v435 = vpop.f32.mrb[0].mxu0
    %v436 = vadd.f32 %v347, %v435
    %v437 = vpop.f32.mrb[0].mxu0
    %438 = vdwg.mxu0
    %439 = vmatprep.subr.mxu0 0.0
    %v440 = vand.u32 %v23, 4294901760
    %v441 = vsub.f32 %v23, %v440
    %v442 = vand.u32 %v441, 4294901760
    %443 = vmatpush1.msra.mxu0 %v442
    %444 = vmatprep.subr.mxu0 0.0
    %v445 = vand.u32 %v24, 4294901760
    %v446 = vsub.f32 %v24, %v445
    %v447 = vand.u32 %v446, 4294901760
    %448 = vmatpush1.msra.mxu0 %v447
    %449 = vmatprep.subr.mxu0 0.0
    %v450 = vand.u32 %v25, 4294901760
    %v451 = vsub.f32 %v25, %v450
    %v452 = vand.u32 %v451, 4294901760
    %453 = vmatpush1.msra.mxu0 %v452
    %454 = vmatprep.subr.mxu0 0.0
    %v455 = vand.u32 %v26, 4294901760
    %v456 = vsub.f32 %v26, %v455
    %v457 = vand.u32 %v456, 4294901760
    %458 = vmatpush1.msra.mxu0 %v457
    %459 = vmatprep.subr.mxu0 0.0
    %v460 = vand.u32 %v27, 4294901760
    %v461 = vsub.f32 %v27, %v460
    %v462 = vand.u32 %v461, 4294901760
    %463 = vmatpush1.msra.mxu0 %v462
    %464 = vmatprep.subr.mxu0 0.0
    %v465 = vand.u32 %v28, 4294901760
    %v466 = vsub.f32 %v28, %v465
    %v467 = vand.u32 %v466, 4294901760
    %468 = vmatpush1.msra.mxu0 %v467
    %469 = vmatprep.subr.mxu0 0.0
    %v470 = vand.u32 %v29, 4294901760
    %v471 = vsub.f32 %v29, %v470
    %v472 = vand.u32 %v471, 4294901760
    %473 = vmatpush1.msra.mxu0 %v472
    %474 = vmatprep.subr.mxu0 0.0
    %v475 = vand.u32 %v30, 4294901760
    %v476 = vsub.f32 %v30, %v475
    %v477 = vand.u32 %v476, 4294901760
    %478 = vmatpush1.msra.mxu0 %v477
    %479 = vmatprep.subr.mxu0 0.0
    %480 = vmatpush1.msra.mxu0 0.0
    %481 = vmatprep.subr.mxu0 0.0
    %482 = vmatpush1.msra.mxu0 0.0
    %483 = vmatprep.subr.mxu0 0.0
    %484 = vmatpush1.msra.mxu0 0.0
    %485 = vmatprep.subr.mxu0 0.0
    %486 = vmatpush1.msra.mxu0 0.0
    %487 = vmatprep.subr.mxu0 0.0
    %488 = vmatpush1.msra.mxu0 0.0
    %489 = vmatprep.subr.mxu0 0.0
    %490 = vmatpush1.msra.mxu0 0.0
    %491 = vmatprep.subr.mxu0 0.0
    %492 = vmatpush1.msra.mxu0 0.0
    %493 = vmatprep.subr.mxu0 0.0
    %494 = vmatpush1.msra.mxu0 0.0
    %495 = vmatprep.subr.mxu0 0.0
    %496 = vmatpush1.msra.mxu0 0.0
    %497 = vmatprep.subr.mxu0 0.0
    %498 = vmatpush1.msra.mxu0 0.0
    %499 = vmatprep.subr.mxu0 0.0
    %500 = vmatpush1.msra.mxu0 0.0
    %501 = vmatprep.subr.mxu0 0.0
    %502 = vmatpush1.msra.mxu0 0.0
    %503 = vmatprep.subr.mxu0 0.0
    %504 = vmatpush1.msra.mxu0 0.0
    %505 = vmatprep.subr.mxu0 0.0
    %506 = vmatpush1.msra.mxu0 0.0
    %507 = vmatprep.subr.mxu0 0.0
    %508 = vmatpush1.msra.mxu0 0.0
    %509 = vmatprep.subr.mxu0 0.0
    %510 = vmatpush1.msra.mxu0 0.0
    %511 = vmatprep.subr.mxu0 0.0
    %512 = vmatpush1.msra.mxu0 0.0
    %513 = vmatprep.subr.mxu0 0.0
    %514 = vmatpush1.msra.mxu0 0.0
    %515 = vmatprep.subr.mxu0 0.0
    %516 = vmatpush1.msra.mxu0 0.0
    %517 = vmatprep.subr.mxu0 0.0
    %518 = vmatpush1.msra.mxu0 0.0
    %519 = vmatprep.subr.mxu0 0.0
    %520 = vmatpush1.msra.mxu0 0.0
    %521 = vmatprep.subr.mxu0 0.0
    %522 = vmatpush1.msra.mxu0 0.0
    %523 = vmatprep.subr.mxu0 0.0
    %524 = vmatpush1.msra.mxu0 0.0
    %525 = vmatprep.subr.mxu0 0.0
    %526 = vmatpush1.msra.mxu0 0.0
    %527 = vmatprep.mubr.f32.mxu0 0.0
    %v528 = vand.u32 %v40, 4294901760
    %529 = vmatmul.mubr.f32.gmra.mrb[0].mxu0 %v528
    %v530 = vpop.f32.mrb[0].mxu0
    %v531 = vadd.f32 %v428, %v530
    %v532 = vpop.f32.mrb[0].mxu0
    %533 = vmatprep.mubr.f32.mxu0 0.0
    %v534 = vand.u32 %v43, 4294901760
    %535 = vmatmul.mubr.f32.gmra.mrb[0].mxu0 %v534
    %v536 = vpop.f32.mrb[0].mxu0
    %v537 = vadd.f32 %v436, %v536
    %v538 = vpop.f32.mrb[0].mxu0
    %539 = vdwg.mxu0
    %540 = vmatprep.subr.mxu0 0.0
    %v541 = vand.u32 %v23, 4294901760
    %542 = vmatpush1.msra.mxu0 %v541
    %543 = vmatprep.subr.mxu0 0.0
    %v544 = vand.u32 %v24, 4294901760
    %545 = vmatpush1.msra.mxu0 %v544
    %546 = vmatprep.subr.mxu0 0.0
    %v547 = vand.u32 %v25, 4294901760
    %548 = vmatpush1.msra.mxu0 %v547
    %549 = vmatprep.subr.mxu0 0.0
    %v550 = vand.u32 %v26, 4294901760
    %551 = vmatpush1.msra.mxu0 %v550
    %552 = vmatprep.subr.mxu0 0.0
    %v553 = vand.u32 %v27, 4294901760
    %554 = vmatpush1.msra.mxu0 %v553
    %555 = vmatprep.subr.mxu0 0.0
    %v556 = vand.u32 %v28, 4294901760
    %557 = vmatpush1.msra.mxu0 %v556
    %558 = vmatprep.subr.mxu0 0.0
    %v559 = vand.u32 %v29, 4294901760
    %560 = vmatpush1.msra.mxu0 %v559
    %561 = vmatprep.subr.mxu0 0.0
    %v562 = vand.u32 %v30, 4294901760
    %563 = vmatpush1.msra.mxu0 %v562
    %564 = vmatprep.subr.mxu0 0.0
    %565 = vmatpush1.msra.mxu0 0.0
    %566 = vmatprep.subr.mxu0 0.0
    %567 = vmatpush1.msra.mxu0 0.0
    %568 = vmatprep.subr.mxu0 0.0
    %569 = vmatpush1.msra.mxu0 0.0
    %570 = vmatprep.subr.mxu0 0.0
    %571 = vmatpush1.msra.mxu0 0.0
    %572 = vmatprep.subr.mxu0 0.0
    %573 = vmatpush1.msra.mxu0 0.0
    %574 = vmatprep.subr.mxu0 0.0
    %575 = vmatpush1.msra.mxu0 0.0
    %576 = vmatprep.subr.mxu0 0.0
    %577 = vmatpush1.msra.mxu0 0.0
    %578 = vmatprep.subr.mxu0 0.0
    %579 = vmatpush1.msra.mxu0 0.0
    %580 = vmatprep.subr.mxu0 0.0
    %581 = vmatpush1.msra.mxu0 0.0
    %582 = vmatprep.subr.mxu0 0.0
    %583 = vmatpush1.msra.mxu0 0.0
    %584 = vmatprep.subr.mxu0 0.0
    %585 = vmatpush1.msra.mxu0 0.0
    %586 = vmatprep.subr.mxu0 0.0
    %587 = vmatpush1.msra.mxu0 0.0
    %588 = vmatprep.subr.mxu0 0.0
    %589 = vmatpush1.msra.mxu0 0.0
    %590 = vmatprep.subr.mxu0 0.0
    %591 = vmatpush1.msra.mxu0 0.0
    %592 = vmatprep.subr.mxu0 0.0
    %593 = vmatpush1.msra.mxu0 0.0
    %594 = vmatprep.subr.mxu0 0.0
    %595 = vmatpush1.msra.mxu0 0.0
    %596 = vmatprep.subr.mxu0 0.0
    %597 = vmatpush1.msra.mxu0 0.0
    %598 = vmatprep.subr.mxu0 0.0
    %599 = vmatpush1.msra.mxu0 0.0
    %600 = vmatprep.subr.mxu0 0.0
    %601 = vmatpush1.msra.mxu0 0.0
    %602 = vmatprep.subr.mxu0 0.0
    %603 = vmatpush1.msra.mxu0 0.0
    %604 = vmatprep.subr.mxu0 0.0
    %605 = vmatpush1.msra.mxu0 0.0
    %606 = vmatprep.subr.mxu0 0.0
    %607 = vmatpush1.msra.mxu0 0.0
    %608 = vmatprep.subr.mxu0 0.0
    %609 = vmatpush1.msra.mxu0 0.0
    %610 = vmatprep.subr.mxu0 0.0
    %611 = vmatpush1.msra.mxu0 0.0
    %612 = vmatprep.mubr.f32.mxu0 0.0
    %v613 = vand.u32 %v40, 4294901760
    %614 = vmatmul.mubr.f32.gmra.mrb[0].mxu0 %v613
    %v615 = vpop.f32.mrb[0].mxu0
    %v616 = vadd.f32 %v531, %v615
    %v617 = vpop.f32.mrb[0].mxu0
    %618 = vmatprep.mubr.f32.mxu0 0.0
    %v619 = vand.u32 %v43, 4294901760
    %620 = vmatmul.mubr.f32.gmra.mrb[0].mxu0 %v619
    %v621 = vpop.f32.mrb[0].mxu0
    %v622 = vadd.f32 %v537, %v621
    %v623 = vpop.f32.mrb[0].mxu0
    %624 = vdwg.mxu0
    %v625 = vld [vmem:[%s3] sm:$0xff]
    %v626 = vld [vmem:[%s3 + $0x8] sm:$0xff]
    %v627 = vld [vmem:[%s3 + $0x10] sm:$0xff]
    %v628 = vld [vmem:[%s3 + $0x18] sm:$0xff]
    %v629 = vld [vmem:[%s4] sm:$0x1]
    %v631 = vlaneseq
    %v632 = vshrl.u32 %v631, 7
    %v633 = vsub.s32 0, %v632
    %v634 = vrot.slane %v629, %v633
    %vm636 = vcmask 261120
    %v638 = vsel %vm636, %v616, 0
    %v641 = vsel %vm636, %v622, 0
    %643 = vmatprep.subr.mxu0 0.0
    %v644 = vand.u32 %v625, 4294901760
    %645 = vmatpush1.msra.mxu0 %v644
    %646 = vmatprep.subr.mxu0 0.0
    %v647 = vand.u32 %v626, 4294901760
    %648 = vmatpush1.msra.mxu0 %v647
    %649 = vmatprep.subr.mxu0 0.0
    %v650 = vand.u32 %v627, 4294901760
    %651 = vmatpush1.msra.mxu0 %v650
    %652 = vmatprep.subr.mxu0 0.0
    %v653 = vand.u32 %v628, 4294901760
    %654 = vmatpush1.msra.mxu0 %v653
    %655 = vmatprep.subr.mxu0 0.0
    %656 = vmatpush1.msra.mxu0 0.0
    %657 = vmatprep.subr.mxu0 0.0
    %658 = vmatpush1.msra.mxu0 0.0
    %659 = vmatprep.subr.mxu0 0.0
    %660 = vmatpush1.msra.mxu0 0.0
    %661 = vmatprep.subr.mxu0 0.0
    %662 = vmatpush1.msra.mxu0 0.0
    %663 = vmatprep.subr.mxu0 0.0
    %664 = vmatpush1.msra.mxu0 0.0
    %665 = vmatprep.subr.mxu0 0.0
    %666 = vmatpush1.msra.mxu0 0.0
    %667 = vmatprep.subr.mxu0 0.0
    %668 = vmatpush1.msra.mxu0 0.0
    %669 = vmatprep.subr.mxu0 0.0
    %670 = vmatpush1.msra.mxu0 0.0
    %671 = vmatprep.subr.mxu0 0.0
    %672 = vmatpush1.msra.mxu0 0.0
    %673 = vmatprep.subr.mxu0 0.0
    %674 = vmatpush1.msra.mxu0 0.0
    %675 = vmatprep.subr.mxu0 0.0
    %676 = vmatpush1.msra.mxu0 0.0
    %677 = vmatprep.subr.mxu0 0.0
    %678 = vmatpush1.msra.mxu0 0.0
    %679 = vmatprep.subr.mxu0 0.0
    %680 = vmatpush1.msra.mxu0 0.0
    %681 = vmatprep.subr.mxu0 0.0
    %682 = vmatpush1.msra.mxu0 0.0
    %683 = vmatprep.subr.mxu0 0.0
    %684 = vmatpush1.msra.mxu0 0.0
    %685 = vmatprep.subr.mxu0 0.0
    %686 = vmatpush1.msra.mxu0 0.0
    %687 = vmatprep.subr.mxu0 0.0
    %688 = vmatpush1.msra.mxu0 0.0
    %689 = vmatprep.subr.mxu0 0.0
    %690 = vmatpush1.msra.mxu0 0.0
    %691 = vmatprep.subr.mxu0 0.0
    %692 = vmatpush1.msra.mxu0 0.0
    %693 = vmatprep.subr.mxu0 0.0
    %694 = vmatpush1.msra.mxu0 0.0
    %695 = vmatprep.subr.mxu0 0.0
    %696 = vmatpush1.msra.mxu0 0.0
    %697 = vmatprep.subr.mxu0 0.0
    %698 = vmatpush1.msra.mxu0 0.0
    %699 = vmatprep.subr.mxu0 0.0
    %700 = vmatpush1.msra.mxu0 0.0
    %701 = vmatprep.subr.mxu0 0.0
    %702 = vmatpush1.msra.mxu0 0.0
    %703 = vmatprep.subr.mxu0 0.0
    %704 = vmatpush1.msra.mxu0 0.0
    %705 = vmatprep.subr.mxu0 0.0
    %706 = vmatpush1.msra.mxu0 0.0
    %707 = vmatprep.subr.mxu0 0.0
    %708 = vmatpush1.msra.mxu0 0.0
    %709 = vmatprep.subr.mxu0 0.0
    %710 = vmatpush1.msra.mxu0 0.0
    %711 = vmatprep.mubr.f32.mxu0 0.0
    %v712 = vand.u32 %v638, 4294901760
    %v713 = vsub.f32 %v638, %v712
    %v714 = vand.u32 %v713, 4294901760
    %v715 = vsub.f32 %v713, %v714
    %v716 = vand.u32 %v715, 4294901760
    %717 = vmatmul.mubr.f32.gmra.mrb[0].mxu0 %v716
    %v718 = vpop.f32.mrb[0].mxu0
    %v719 = vadd.f32 %v634, %v718
    %v720 = vpop.f32.mrb[0].mxu0
    %721 = vmatprep.mubr.f32.mxu0 0.0
    %v722 = vand.u32 %v641, 4294901760
    %v723 = vsub.f32 %v641, %v722
    %v724 = vand.u32 %v723, 4294901760
    %v725 = vsub.f32 %v723, %v724
    %v726 = vand.u32 %v725, 4294901760
    %727 = vmatmul.mubr.f32.gmra.mrb[0].mxu0 %v726
    %v728 = vpop.f32.mrb[0].mxu0
    %v729 = vadd.f32 %v634, %v728
    %v730 = vpop.f32.mrb[0].mxu0
    %731 = vdwg.mxu0
    %732 = vmatprep.subr.mxu0 0.0
    %v733 = vand.u32 %v625, 4294901760
    %v734 = vsub.f32 %v625, %v733
    %v735 = vand.u32 %v734, 4294901760
    %v736 = vsub.f32 %v734, %v735
    %v737 = vand.u32 %v736, 4294901760
    %738 = vmatpush1.msra.mxu0 %v737
    %739 = vmatprep.subr.mxu0 0.0
    %v740 = vand.u32 %v626, 4294901760
    %v741 = vsub.f32 %v626, %v740
    %v742 = vand.u32 %v741, 4294901760
    %v743 = vsub.f32 %v741, %v742
    %v744 = vand.u32 %v743, 4294901760
    %745 = vmatpush1.msra.mxu0 %v744
    %746 = vmatprep.subr.mxu0 0.0
    %v747 = vand.u32 %v627, 4294901760
    %v748 = vsub.f32 %v627, %v747
    %v749 = vand.u32 %v748, 4294901760
    %v750 = vsub.f32 %v748, %v749
    %v751 = vand.u32 %v750, 4294901760
    %752 = vmatpush1.msra.mxu0 %v751
    %753 = vmatprep.subr.mxu0 0.0
    %v754 = vand.u32 %v628, 4294901760
    %v755 = vsub.f32 %v628, %v754
    %v756 = vand.u32 %v755, 4294901760
    %v757 = vsub.f32 %v755, %v756
    %v758 = vand.u32 %v757, 4294901760
    %759 = vmatpush1.msra.mxu0 %v758
    %760 = vmatprep.subr.mxu0 0.0
    %761 = vmatpush1.msra.mxu0 0.0
    %762 = vmatprep.subr.mxu0 0.0
    %763 = vmatpush1.msra.mxu0 0.0
    %764 = vmatprep.subr.mxu0 0.0
    %765 = vmatpush1.msra.mxu0 0.0
    %766 = vmatprep.subr.mxu0 0.0
    %767 = vmatpush1.msra.mxu0 0.0
    %768 = vmatprep.subr.mxu0 0.0
    %769 = vmatpush1.msra.mxu0 0.0
    %770 = vmatprep.subr.mxu0 0.0
    %771 = vmatpush1.msra.mxu0 0.0
    %772 = vmatprep.subr.mxu0 0.0
    %773 = vmatpush1.msra.mxu0 0.0
    %774 = vmatprep.subr.mxu0 0.0
    %775 = vmatpush1.msra.mxu0 0.0
    %776 = vmatprep.subr.mxu0 0.0
    %777 = vmatpush1.msra.mxu0 0.0
    %778 = vmatprep.subr.mxu0 0.0
    %779 = vmatpush1.msra.mxu0 0.0
    %780 = vmatprep.subr.mxu0 0.0
    %781 = vmatpush1.msra.mxu0 0.0
    %782 = vmatprep.subr.mxu0 0.0
    %783 = vmatpush1.msra.mxu0 0.0
    %784 = vmatprep.subr.mxu0 0.0
    %785 = vmatpush1.msra.mxu0 0.0
    %786 = vmatprep.subr.mxu0 0.0
    %787 = vmatpush1.msra.mxu0 0.0
    %788 = vmatprep.subr.mxu0 0.0
    %789 = vmatpush1.msra.mxu0 0.0
    %790 = vmatprep.subr.mxu0 0.0
    %791 = vmatpush1.msra.mxu0 0.0
    %792 = vmatprep.subr.mxu0 0.0
    %793 = vmatpush1.msra.mxu0 0.0
    %794 = vmatprep.subr.mxu0 0.0
    %795 = vmatpush1.msra.mxu0 0.0
    %796 = vmatprep.subr.mxu0 0.0
    %797 = vmatpush1.msra.mxu0 0.0
    %798 = vmatprep.subr.mxu0 0.0
    %799 = vmatpush1.msra.mxu0 0.0
    %800 = vmatprep.subr.mxu0 0.0
    %801 = vmatpush1.msra.mxu0 0.0
    %802 = vmatprep.subr.mxu0 0.0
    %803 = vmatpush1.msra.mxu0 0.0
    %804 = vmatprep.subr.mxu0 0.0
    %805 = vmatpush1.msra.mxu0 0.0
    %806 = vmatprep.subr.mxu0 0.0
    %807 = vmatpush1.msra.mxu0 0.0
    %808 = vmatprep.subr.mxu0 0.0
    %809 = vmatpush1.msra.mxu0 0.0
    %810 = vmatprep.subr.mxu0 0.0
    %811 = vmatpush1.msra.mxu0 0.0
    %812 = vmatprep.subr.mxu0 0.0
    %813 = vmatpush1.msra.mxu0 0.0
    %814 = vmatprep.subr.mxu0 0.0
    %815 = vmatpush1.msra.mxu0 0.0
    %816 = vmatprep.mubr.f32.mxu0 0.0
    %v817 = vand.u32 %v638, 4294901760
    %818 = vmatmul.mubr.f32.gmra.mrb[0].mxu0 %v817
    %v819 = vpop.f32.mrb[0].mxu0
    %v820 = vadd.f32 %v719, %v819
    %v821 = vpop.f32.mrb[0].mxu0
    %822 = vmatprep.mubr.f32.mxu0 0.0
    %v823 = vand.u32 %v641, 4294901760
    %824 = vmatmul.mubr.f32.gmra.mrb[0].mxu0 %v823
    %v825 = vpop.f32.mrb[0].mxu0
    %v826 = vadd.f32 %v729, %v825
    %v827 = vpop.f32.mrb[0].mxu0
    %828 = vdwg.mxu0
    %829 = vmatprep.subr.mxu0 0.0
    %v830 = vand.u32 %v625, 4294901760
    %v831 = vsub.f32 %v625, %v830
    %832 = vmatpush1.msra.mxu0 %v831
    %833 = vmatprep.subr.mxu0 0.0
    %v834 = vand.u32 %v626, 4294901760
    %v835 = vsub.f32 %v626, %v834
    %836 = vmatpush1.msra.mxu0 %v835
    %837 = vmatprep.subr.mxu0 0.0
    %v838 = vand.u32 %v627, 4294901760
    %v839 = vsub.f32 %v627, %v838
    %840 = vmatpush1.msra.mxu0 %v839
    %841 = vmatprep.subr.mxu0 0.0
    %v842 = vand.u32 %v628, 4294901760
    %v843 = vsub.f32 %v628, %v842
    %844 = vmatpush1.msra.mxu0 %v843
    %845 = vmatprep.subr.mxu0 0.0
    %846 = vmatpush1.msra.mxu0 0.0
    %847 = vmatprep.subr.mxu0 0.0
    %848 = vmatpush1.msra.mxu0 0.0
    %849 = vmatprep.subr.mxu0 0.0
    %850 = vmatpush1.msra.mxu0 0.0
    %851 = vmatprep.subr.mxu0 0.0
    %852 = vmatpush1.msra.mxu0 0.0
    %853 = vmatprep.subr.mxu0 0.0
    %854 = vmatpush1.msra.mxu0 0.0
    %855 = vmatprep.subr.mxu0 0.0
    %856 = vmatpush1.msra.mxu0 0.0
    %857 = vmatprep.subr.mxu0 0.0
    %858 = vmatpush1.msra.mxu0 0.0
    %859 = vmatprep.subr.mxu0 0.0
    %860 = vmatpush1.msra.mxu0 0.0
    %861 = vmatprep.subr.mxu0 0.0
    %862 = vmatpush1.msra.mxu0 0.0
    %863 = vmatprep.subr.mxu0 0.0
    %864 = vmatpush1.msra.mxu0 0.0
    %865 = vmatprep.subr.mxu0 0.0
    %866 = vmatpush1.msra.mxu0 0.0
    %867 = vmatprep.subr.mxu0 0.0
    %868 = vmatpush1.msra.mxu0 0.0
    %869 = vmatprep.subr.mxu0 0.0
    %870 = vmatpush1.msra.mxu0 0.0
    %871 = vmatprep.subr.mxu0 0.0
    %872 = vmatpush1.msra.mxu0 0.0
    %873 = vmatprep.subr.mxu0 0.0
    %874 = vmatpush1.msra.mxu0 0.0
    %875 = vmatprep.subr.mxu0 0.0
    %876 = vmatpush1.msra.mxu0 0.0
    %877 = vmatprep.subr.mxu0 0.0
    %878 = vmatpush1.msra.mxu0 0.0
    %879 = vmatprep.subr.mxu0 0.0
    %880 = vmatpush1.msra.mxu0 0.0
    %881 = vmatprep.subr.mxu0 0.0
    %882 = vmatpush1.msra.mxu0 0.0
    %883 = vmatprep.subr.mxu0 0.0
    %884 = vmatpush1.msra.mxu0 0.0
    %885 = vmatprep.subr.mxu0 0.0
    %886 = vmatpush1.msra.mxu0 0.0
    %887 = vmatprep.subr.mxu0 0.0
    %888 = vmatpush1.msra.mxu0 0.0
    %889 = vmatprep.subr.mxu0 0.0
    %890 = vmatpush1.msra.mxu0 0.0
    %891 = vmatprep.subr.mxu0 0.0
    %892 = vmatpush1.msra.mxu0 0.0
    %893 = vmatprep.subr.mxu0 0.0
    %894 = vmatpush1.msra.mxu0 0.0
    %895 = vmatprep.subr.mxu0 0.0
    %896 = vmatpush1.msra.mxu0 0.0
    %897 = vmatprep.subr.mxu0 0.0
    %898 = vmatpush1.msra.mxu0 0.0
    %899 = vmatprep.subr.mxu0 0.0
    %900 = vmatpush1.msra.mxu0 0.0
    %901 = vmatprep.mubr.f32.mxu0 0.0
    %v902 = vand.u32 %v638, 4294901760
    %v903 = vsub.f32 %v638, %v902
    %904 = vmatmul.mubr.f32.gmra.mrb[0].mxu0 %v903
    %v905 = vpop.f32.mrb[0].mxu0
    %v906 = vadd.f32 %v820, %v905
    %v907 = vpop.f32.mrb[0].mxu0
    %908 = vmatprep.mubr.f32.mxu0 0.0
    %v909 = vand.u32 %v641, 4294901760
    %v910 = vsub.f32 %v641, %v909
    %911 = vmatmul.mubr.f32.gmra.mrb[0].mxu0 %v910
    %v912 = vpop.f32.mrb[0].mxu0
    %v913 = vadd.f32 %v826, %v912
    %v914 = vpop.f32.mrb[0].mxu0
    %915 = vdwg.mxu0
    %916 = vmatprep.subr.mxu0 0.0
    %v917 = vand.u32 %v625, 4294901760
    %918 = vmatpush1.msra.mxu0 %v917
    %919 = vmatprep.subr.mxu0 0.0
    %v920 = vand.u32 %v626, 4294901760
    %921 = vmatpush1.msra.mxu0 %v920
    %922 = vmatprep.subr.mxu0 0.0
    %v923 = vand.u32 %v627, 4294901760
    %924 = vmatpush1.msra.mxu0 %v923
    %925 = vmatprep.subr.mxu0 0.0
    %v926 = vand.u32 %v628, 4294901760
    %927 = vmatpush1.msra.mxu0 %v926
    %928 = vmatprep.subr.mxu0 0.0
    %929 = vmatpush1.msra.mxu0 0.0
    %930 = vmatprep.subr.mxu0 0.0
    %931 = vmatpush1.msra.mxu0 0.0
    %932 = vmatprep.subr.mxu0 0.0
    %933 = vmatpush1.msra.mxu0 0.0
    %934 = vmatprep.subr.mxu0 0.0
    %935 = vmatpush1.msra.mxu0 0.0
    %936 = vmatprep.subr.mxu0 0.0
    %937 = vmatpush1.msra.mxu0 0.0
    %938 = vmatprep.subr.mxu0 0.0
    %939 = vmatpush1.msra.mxu0 0.0
    %940 = vmatprep.subr.mxu0 0.0
    %941 = vmatpush1.msra.mxu0 0.0
    %942 = vmatprep.subr.mxu0 0.0
    %943 = vmatpush1.msra.mxu0 0.0
    %944 = vmatprep.subr.mxu0 0.0
    %945 = vmatpush1.msra.mxu0 0.0
    %946 = vmatprep.subr.mxu0 0.0
    %947 = vmatpush1.msra.mxu0 0.0
    %948 = vmatprep.subr.mxu0 0.0
    %949 = vmatpush1.msra.mxu0 0.0
    %950 = vmatprep.subr.mxu0 0.0
    %951 = vmatpush1.msra.mxu0 0.0
    %952 = vmatprep.subr.mxu0 0.0
    %953 = vmatpush1.msra.mxu0 0.0
    %954 = vmatprep.subr.mxu0 0.0
    %955 = vmatpush1.msra.mxu0 0.0
    %956 = vmatprep.subr.mxu0 0.0
    %957 = vmatpush1.msra.mxu0 0.0
    %958 = vmatprep.subr.mxu0 0.0
    %959 = vmatpush1.msra.mxu0 0.0
    %960 = vmatprep.subr.mxu0 0.0
    %961 = vmatpush1.msra.mxu0 0.0
    %962 = vmatprep.subr.mxu0 0.0
    %963 = vmatpush1.msra.mxu0 0.0
    %964 = vmatprep.subr.mxu0 0.0
    %965 = vmatpush1.msra.mxu0 0.0
    %966 = vmatprep.subr.mxu0 0.0
    %967 = vmatpush1.msra.mxu0 0.0
    %968 = vmatprep.subr.mxu0 0.0
    %969 = vmatpush1.msra.mxu0 0.0
    %970 = vmatprep.subr.mxu0 0.0
    %971 = vmatpush1.msra.mxu0 0.0
    %972 = vmatprep.subr.mxu0 0.0
    %973 = vmatpush1.msra.mxu0 0.0
    %974 = vmatprep.subr.mxu0 0.0
    %975 = vmatpush1.msra.mxu0 0.0
    %976 = vmatprep.subr.mxu0 0.0
    %977 = vmatpush1.msra.mxu0 0.0
    %978 = vmatprep.subr.mxu0 0.0
    %979 = vmatpush1.msra.mxu0 0.0
    %980 = vmatprep.subr.mxu0 0.0
    %981 = vmatpush1.msra.mxu0 0.0
    %982 = vmatprep.subr.mxu0 0.0
    %983 = vmatpush1.msra.mxu0 0.0
    %984 = vmatprep.mubr.f32.mxu0 0.0
    %v985 = vand.u32 %v638, 4294901760
    %v986 = vsub.f32 %v638, %v985
    %v987 = vand.u32 %v986, 4294901760
    %988 = vmatmul.mubr.f32.gmra.mrb[0].mxu0 %v987
    %v989 = vpop.f32.mrb[0].mxu0
    %v990 = vadd.f32 %v906, %v989
    %v991 = vpop.f32.mrb[0].mxu0
    %992 = vmatprep.mubr.f32.mxu0 0.0
    %v993 = vand.u32 %v641, 4294901760
    %v994 = vsub.f32 %v641, %v993
    %v995 = vand.u32 %v994, 4294901760
    %996 = vmatmul.mubr.f32.gmra.mrb[0].mxu0 %v995
    %v997 = vpop.f32.mrb[0].mxu0
    %v998 = vadd.f32 %v913, %v997
    %v999 = vpop.f32.mrb[0].mxu0
    %1000 = vdwg.mxu0
    %1001 = vmatprep.subr.mxu0 0.0
    %v1002 = vand.u32 %v625, 4294901760
    %v1003 = vsub.f32 %v625, %v1002
    %v1004 = vand.u32 %v1003, 4294901760
    %1005 = vmatpush1.msra.mxu0 %v1004
    %1006 = vmatprep.subr.mxu0 0.0
    %v1007 = vand.u32 %v626, 4294901760
    %v1008 = vsub.f32 %v626, %v1007
    %v1009 = vand.u32 %v1008, 4294901760
    %1010 = vmatpush1.msra.mxu0 %v1009
    %1011 = vmatprep.subr.mxu0 0.0
    %v1012 = vand.u32 %v627, 4294901760
    %v1013 = vsub.f32 %v627, %v1012
    %v1014 = vand.u32 %v1013, 4294901760
    %1015 = vmatpush1.msra.mxu0 %v1014
    %1016 = vmatprep.subr.mxu0 0.0
    %v1017 = vand.u32 %v628, 4294901760
    %v1018 = vsub.f32 %v628, %v1017
    %v1019 = vand.u32 %v1018, 4294901760
    %1020 = vmatpush1.msra.mxu0 %v1019
    %1021 = vmatprep.subr.mxu0 0.0
    %1022 = vmatpush1.msra.mxu0 0.0
    %1023 = vmatprep.subr.mxu0 0.0
    %1024 = vmatpush1.msra.mxu0 0.0
    %1025 = vmatprep.subr.mxu0 0.0
    %1026 = vmatpush1.msra.mxu0 0.0
    %1027 = vmatprep.subr.mxu0 0.0
    %1028 = vmatpush1.msra.mxu0 0.0
    %1029 = vmatprep.subr.mxu0 0.0
    %1030 = vmatpush1.msra.mxu0 0.0
    %1031 = vmatprep.subr.mxu0 0.0
    %1032 = vmatpush1.msra.mxu0 0.0
    %1033 = vmatprep.subr.mxu0 0.0
    %1034 = vmatpush1.msra.mxu0 0.0
    %1035 = vmatprep.subr.mxu0 0.0
    %1036 = vmatpush1.msra.mxu0 0.0
    %1037 = vmatprep.subr.mxu0 0.0
    %1038 = vmatpush1.msra.mxu0 0.0
    %1039 = vmatprep.subr.mxu0 0.0
    %1040 = vmatpush1.msra.mxu0 0.0
    %1041 = vmatprep.subr.mxu0 0.0
    %1042 = vmatpush1.msra.mxu0 0.0
    %1043 = vmatprep.subr.mxu0 0.0
    %1044 = vmatpush1.msra.mxu0 0.0
    %1045 = vmatprep.subr.mxu0 0.0
    %1046 = vmatpush1.msra.mxu0 0.0
    %1047 = vmatprep.subr.mxu0 0.0
    %1048 = vmatpush1.msra.mxu0 0.0
    %1049 = vmatprep.subr.mxu0 0.0
    %1050 = vmatpush1.msra.mxu0 0.0
    %1051 = vmatprep.subr.mxu0 0.0
    %1052 = vmatpush1.msra.mxu0 0.0
    %1053 = vmatprep.subr.mxu0 0.0
    %1054 = vmatpush1.msra.mxu0 0.0
    %1055 = vmatprep.subr.mxu0 0.0
    %1056 = vmatpush1.msra.mxu0 0.0
    %1057 = vmatprep.subr.mxu0 0.0
    %1058 = vmatpush1.msra.mxu0 0.0
    %1059 = vmatprep.subr.mxu0 0.0
    %1060 = vmatpush1.msra.mxu0 0.0
    %1061 = vmatprep.subr.mxu0 0.0
    %1062 = vmatpush1.msra.mxu0 0.0
    %1063 = vmatprep.subr.mxu0 0.0
    %1064 = vmatpush1.msra.mxu0 0.0
    %1065 = vmatprep.subr.mxu0 0.0
    %1066 = vmatpush1.msra.mxu0 0.0
    %1067 = vmatprep.subr.mxu0 0.0
    %1068 = vmatpush1.msra.mxu0 0.0
    %1069 = vmatprep.subr.mxu0 0.0
    %1070 = vmatpush1.msra.mxu0 0.0
    %1071 = vmatprep.subr.mxu0 0.0
    %1072 = vmatpush1.msra.mxu0 0.0
    %1073 = vmatprep.subr.mxu0 0.0
    %1074 = vmatpush1.msra.mxu0 0.0
    %1075 = vmatprep.subr.mxu0 0.0
    %1076 = vmatpush1.msra.mxu0 0.0
    %1077 = vmatprep.mubr.f32.mxu0 0.0
    %v1078 = vand.u32 %v638, 4294901760
    %1079 = vmatmul.mubr.f32.gmra.mrb[0].mxu0 %v1078
    %v1080 = vpop.f32.mrb[0].mxu0
    %v1081 = vadd.f32 %v990, %v1080
    %v1082 = vpop.f32.mrb[0].mxu0
    %1083 = vmatprep.mubr.f32.mxu0 0.0
    %v1084 = vand.u32 %v641, 4294901760
    %1085 = vmatmul.mubr.f32.gmra.mrb[0].mxu0 %v1084
    %v1086 = vpop.f32.mrb[0].mxu0
    %v1087 = vadd.f32 %v998, %v1086
    %v1088 = vpop.f32.mrb[0].mxu0
    %1089 = vdwg.mxu0
    %1090 = vmatprep.subr.mxu0 0.0
    %v1091 = vand.u32 %v625, 4294901760
    %1092 = vmatpush1.msra.mxu0 %v1091
    %1093 = vmatprep.subr.mxu0 0.0
    %v1094 = vand.u32 %v626, 4294901760
    %1095 = vmatpush1.msra.mxu0 %v1094
    %1096 = vmatprep.subr.mxu0 0.0
    %v1097 = vand.u32 %v627, 4294901760
    %1098 = vmatpush1.msra.mxu0 %v1097
    %1099 = vmatprep.subr.mxu0 0.0
    %v1100 = vand.u32 %v628, 4294901760
    %1101 = vmatpush1.msra.mxu0 %v1100
    %1102 = vmatprep.subr.mxu0 0.0
    %1103 = vmatpush1.msra.mxu0 0.0
    %1104 = vmatprep.subr.mxu0 0.0
    %1105 = vmatpush1.msra.mxu0 0.0
    %1106 = vmatprep.subr.mxu0 0.0
    %1107 = vmatpush1.msra.mxu0 0.0
    %1108 = vmatprep.subr.mxu0 0.0
    %1109 = vmatpush1.msra.mxu0 0.0
    %1110 = vmatprep.subr.mxu0 0.0
    %1111 = vmatpush1.msra.mxu0 0.0
    %1112 = vmatprep.subr.mxu0 0.0
    %1113 = vmatpush1.msra.mxu0 0.0
    %1114 = vmatprep.subr.mxu0 0.0
    %1115 = vmatpush1.msra.mxu0 0.0
    %1116 = vmatprep.subr.mxu0 0.0
    %1117 = vmatpush1.msra.mxu0 0.0
    %1118 = vmatprep.subr.mxu0 0.0
    %1119 = vmatpush1.msra.mxu0 0.0
    %1120 = vmatprep.subr.mxu0 0.0
    %1121 = vmatpush1.msra.mxu0 0.0
    %1122 = vmatprep.subr.mxu0 0.0
    %1123 = vmatpush1.msra.mxu0 0.0
    %1124 = vmatprep.subr.mxu0 0.0
    %1125 = vmatpush1.msra.mxu0 0.0
    %1126 = vmatprep.subr.mxu0 0.0
    %1127 = vmatpush1.msra.mxu0 0.0
    %1128 = vmatprep.subr.mxu0 0.0
    %1129 = vmatpush1.msra.mxu0 0.0
    %1130 = vmatprep.subr.mxu0 0.0
    %1131 = vmatpush1.msra.mxu0 0.0
    %1132 = vmatprep.subr.mxu0 0.0
    %1133 = vmatpush1.msra.mxu0 0.0
    %1134 = vmatprep.subr.mxu0 0.0
    %1135 = vmatpush1.msra.mxu0 0.0
    %1136 = vmatprep.subr.mxu0 0.0
    %1137 = vmatpush1.msra.mxu0 0.0
    %1138 = vmatprep.subr.mxu0 0.0
    %1139 = vmatpush1.msra.mxu0 0.0
    %1140 = vmatprep.subr.mxu0 0.0
    %1141 = vmatpush1.msra.mxu0 0.0
    %1142 = vmatprep.subr.mxu0 0.0
    %1143 = vmatpush1.msra.mxu0 0.0
    %1144 = vmatprep.subr.mxu0 0.0
    %1145 = vmatpush1.msra.mxu0 0.0
    %1146 = vmatprep.subr.mxu0 0.0
    %1147 = vmatpush1.msra.mxu0 0.0
    %1148 = vmatprep.subr.mxu0 0.0
    %1149 = vmatpush1.msra.mxu0 0.0
    %1150 = vmatprep.subr.mxu0 0.0
    %1151 = vmatpush1.msra.mxu0 0.0
    %1152 = vmatprep.subr.mxu0 0.0
    %1153 = vmatpush1.msra.mxu0 0.0
    %1154 = vmatprep.subr.mxu0 0.0
    %1155 = vmatpush1.msra.mxu0 0.0
    %1156 = vmatprep.subr.mxu0 0.0
    %1157 = vmatpush1.msra.mxu0 0.0
    %1158 = vmatprep.mubr.f32.mxu0 0.0
    %v1159 = vand.u32 %v638, 4294901760
    %1160 = vmatmul.mubr.f32.gmra.mrb[0].mxu0 %v1159
    %v1161 = vpop.f32.mrb[0].mxu0
    %v1162 = vadd.f32 %v1081, %v1161
    %v1163 = vpop.f32.mrb[0].mxu0
    %1164 = vmatprep.mubr.f32.mxu0 0.0
    %v1165 = vand.u32 %v641, 4294901760
    %1166 = vmatmul.mubr.f32.gmra.mrb[0].mxu0 %v1165
    %v1167 = vpop.f32.mrb[0].mxu0
    %v1168 = vadd.f32 %v1087, %v1167
    %v1169 = vpop.f32.mrb[0].mxu0
    %1170 = vdwg.mxu0
    %vm1171 = vcmask 130048
    %1172 = vst.msk [vmem:[#allocation2] sm:$0xff] %vm1171, %v1162
    %1173 = vst.msk [vmem:[#allocation2 + $0x8] sm:$0xff] %vm1171, %v1168
    // Predicated region
    $region22: #{tpu_custom_call.1} parent=1 // pred_check
      _
    $region23: #{tpu_custom_call.1} parent=1 // pred_check_branch
      %1175 = sbr.rel (0) target = $region25
    $region24: #{tpu_custom_call.1} parent=1 // pred_region
      %s1177 = ssub.s32 256, 256
      %1178 = vsyncadd [#allocation3], %s1177
      %s1179 = sshll.u32 [#allocation2], 4
      %s1180 = int_to_ptr.vmem [resolvable:$true] %s1179
      %1185 = dma.vmem_to_hbm [thread:$0]  %s1180, 256, %s5, [#allocation3], 128, 128, 8
    $region25: #{tpu_custom_call.1} parent=1 // pred_fallthru
      _
    // Predicated region
    $region26: #{tpu_custom_call.1} parent=1 // pred_check
      _
    $region27: #{tpu_custom_call.1} parent=1 // pred_check_branch
      %1187 = sbr.rel (0) target = $region29
    $region28: #{tpu_custom_call.1} parent=1 // pred_region
      %1188 = dma.done [#allocation3], 256
    $region29: #{tpu_custom_call.1} parent=1 // pred_fallthru
      _
    %1189 = vsyncpa [#allocation3], 1

</llo_original>
